<compile_context>
chip_gen: v7x
topology: tpu7x:2x2x1
jax: 0.10.0
libtpu: 0.0.40
codegen_flags: <defaults>
</compile_context>

<pallas_src>
import jax
import jax.numpy as jnp
from jax.experimental import pallas as pl
from jax.experimental.pallas import tpu as pltpu


def _round_up(a, b):
    return pl.cdiv(a, b) * b


def _policy_kernel(x_ref, w1_ref, b1_ref, wh_ref, bh_ref, o_ref):
    # x:  [TB, D_in]   (D_in tiny, e.g. 3)
    # w1: [D_in, H_pad], b1: [1, H_pad]
    # wh: [H_pad, C_pad] (wm|wb|wq fused + zero-padded), bh: [1, C_pad]
    x = x_ref[...]
    w1 = w1_ref[...]
    d_in = x.shape[1]

    # Trunk Linear(D_in -> H_pad) as D_in VPU broadcast-FMAs (K=3 would waste an
    # entire MXU round trip for 3 MACs per output).  Static Python unroll.
    h = x[:, 0:1] * w1[0:1, :]
    for j in range(1, d_in):
        h = h + x[:, j : j + 1] * w1[j : j + 1, :]
    h = jnp.maximum(h + b1_ref[...], 0.0)            # ReLU, [TB, H_pad]

    # Fused, lane-dense head matmul on the MXU: one [TB,H_pad]x[H_pad,C_pad] dot,
    # one unmasked store of the full [TB, C_pad] slab.
    o_ref[...] = (
        jnp.dot(h, wh_ref[...], preferred_element_type=jnp.float32) + bh_ref[...]
    )


def multi_head_policy_forward(x, params):
    """x: [B, input_dim] f32.  Returns (model_logits, batch_logits, quant_logits)."""
    (w1, b1, wm, bm, wb, bb, wq, bq) = params
    B, d_in = x.shape
    hidden = w1.shape[1]
    mc, bc, qc = wm.shape[1], wb.shape[1], wq.shape[1]
    c_total = mc + bc + qc

    # Pad everything to clean (8, 128) tiles.  Zero padding is numerically exact:
    # padded hidden units are relu(0)=0 and their head-weight rows are 0; padded
    # output columns have zero weight & bias and are sliced off below.
    H_pad = _round_up(hidden, 128)
    C_pad = _round_up(c_total, 128)
    TB = min(_round_up(B, 8), 128)
    B_pad = _round_up(B, TB)

    x_p = x if B_pad == B else jnp.zeros((B_pad, d_in), x.dtype).at[:B].set(x)

    w1_p = jnp.zeros((d_in, H_pad), jnp.float32).at[:, :hidden].set(w1)
    b1_p = jnp.zeros((1, H_pad), jnp.float32).at[:, :hidden].set(b1.reshape(1, hidden))

    wh_p = jnp.zeros((H_pad, C_pad), jnp.float32)
    wh_p = wh_p.at[:hidden, :mc].set(wm)
    wh_p = wh_p.at[:hidden, mc : mc + bc].set(wb)
    wh_p = wh_p.at[:hidden, mc + bc : c_total].set(wq)

    bh_p = jnp.zeros((1, C_pad), jnp.float32)
    bh_p = bh_p.at[:, :mc].set(bm.reshape(1, mc))
    bh_p = bh_p.at[:, mc : mc + bc].set(bb.reshape(1, bc))
    bh_p = bh_p.at[:, mc + bc : c_total].set(bq.reshape(1, qc))

    slab = pl.pallas_call(
        _policy_kernel,
        grid=(B_pad // TB,),
        in_specs=[
            pl.BlockSpec((TB, d_in), lambda i: (i, 0)),     # x tile (parallel over batch)
            pl.BlockSpec((d_in, H_pad), lambda i: (0, 0)),  # trunk weight (resident)
            pl.BlockSpec((1, H_pad), lambda i: (0, 0)),     # trunk bias
            pl.BlockSpec((H_pad, C_pad), lambda i: (0, 0)), # fused head weight
            pl.BlockSpec((1, C_pad), lambda i: (0, 0)),     # fused head bias
        ],
        out_specs=pl.BlockSpec((TB, C_pad), lambda i: (i, 0)),
        out_shape=jax.ShapeDtypeStruct((B_pad, C_pad), jnp.float32),
        compiler_params=pltpu.CompilerParams(
            dimension_semantics=("parallel",),
        ),
    )(x_p, w1_p, b1_p, wh_p, bh_p)

    logits = slab[:B]
    return (
        logits[:, :mc],
        logits[:, mc : mc + bc],
        logits[:, mc + bc : c_total],
    )


def init_params(key, input_dim, hidden_dim, model_classes, batch_classes, quant_classes):
    """Deterministic synthetic parameter init (same shapes as the PyTorch module,
    with weights stored [in, out] and biases [1, out])."""
    ks = jax.random.split(key, 8)
    scale = 0.1
    w1 = scale * jax.random.normal(ks[0], (input_dim, hidden_dim), jnp.float32)
    b1 = scale * jax.random.normal(ks[1], (1, hidden_dim), jnp.float32)
    wm = scale * jax.random.normal(ks[2], (hidden_dim, model_classes), jnp.float32)
    bm = scale * jax.random.normal(ks[3], (1, model_classes), jnp.float32)
    wb = scale * jax.random.normal(ks[4], (hidden_dim, batch_classes), jnp.float32)
    bb = scale * jax.random.normal(ks[5], (1, batch_classes), jnp.float32)
    wq = scale * jax.random.normal(ks[6], (hidden_dim, quant_classes), jnp.float32)
    bq = scale * jax.random.normal(ks[7], (1, quant_classes), jnp.float32)
    return (w1, b1, wm, bm, wb, bb, wq, bq)


def reference_forward(x, params):
    (w1, b1, wm, bm, wb, bb, wq, bq) = params
    h = jnp.maximum(x @ w1 + b1, 0.0)
    return (h @ wm + bm, h @ wb + bb, h @ wq + bq)


if __name__ == "__main__":
    # Small shapes consistent with the module's forward:
    # input_dim = 3 (from the script), hidden_dim = 64, 3 classification heads.
    B = 8
    input_dim = 3
    hidden_dim = 64
    model_classes = 5    # len(model_le.classes_) -- synthetic
    batch_classes = 4    # len(batch_le.classes_) -- synthetic
    quant_classes = 3    # len(quant_le.classes_) -- synthetic

    key = jax.random.PRNGKey(0)
    k_x, k_p = jax.random.split(key)
    x = jax.random.normal(k_x, (B, input_dim), jnp.float32)
    params = init_params(k_p, input_dim, hidden_dim,
                         model_classes, batch_classes, quant_classes)

    outs = multi_head_policy_forward(x, params)
    outs = jax.block_until_ready(outs)

    refs = reference_forward(x, params)
    for o, r in zip(outs, refs):
        assert o.shape == r.shape and o.dtype == r.dtype
        assert jnp.max(jnp.abs(o - r)) < 1e-4

    print("KERNEL_OK")
</pallas_src>

<mosaic_0001>
module attributes {stable_mosaic.version = 11 : i64} {
  func.func @_policy_kernel(%arg0: i32, %arg1: memref<8x3xf32, #tpu.memory_space<vmem>>, %arg2: memref<3x128xf32, #tpu.memory_space<vmem>>, %arg3: memref<1x128xf32, #tpu.memory_space<vmem>>, %arg4: memref<128x128xf32, #tpu.memory_space<vmem>>, %arg5: memref<1x128xf32, #tpu.memory_space<vmem>>, %arg6: memref<8x128xf32, #tpu.memory_space<vmem>>) attributes {dimension_semantics = [#tpu.dimension_semantics<parallel>], iteration_bounds = array<i64: 1>, scalar_prefetch = 0 : i64, scratch_operands = 0 : i64, tpu.core_type = #tpu.core_type<tc>, window_params = [{transform_indices = @transform_0, window_bounds = array<i64: 8, 3>}, {pipeline_mode = #tpu.pipeline_mode<synchronous>, transform_indices = @transform_1, window_bounds = array<i64: 3, 128>}, {pipeline_mode = #tpu.pipeline_mode<synchronous>, transform_indices = @transform_2, window_bounds = array<i64: 1, 128>}, {pipeline_mode = #tpu.pipeline_mode<synchronous>, transform_indices = @transform_3, window_bounds = array<i64: 128, 128>}, {pipeline_mode = #tpu.pipeline_mode<synchronous>, transform_indices = @transform_4, window_bounds = array<i64: 1, 128>}, {transform_indices = @transform_5, window_bounds = array<i64: 8, 128>}]} {
    %c0 = arith.constant 0 : index
    %c0_0 = arith.constant 0 : index
    %0 = vector.load %arg1[%c0, %c0_0] : memref<8x3xf32, #tpu.memory_space<vmem>>, vector<8x3xf32>
    %c0_1 = arith.constant 0 : index
    %c0_2 = arith.constant 0 : index
    %1 = vector.load %arg2[%c0_1, %c0_2] : memref<3x128xf32, #tpu.memory_space<vmem>>, vector<3x128xf32>
    %2 = vector.extract_strided_slice %0 {offsets = [0, 0], sizes = [8, 1], strides = [1, 1]} : vector<8x3xf32> to vector<8x1xf32>
    %3 = vector.extract_strided_slice %1 {offsets = [0, 0], sizes = [1, 128], strides = [1, 1]} : vector<3x128xf32> to vector<1x128xf32>
    %4 = vector.broadcast %2 : vector<8x1xf32> to vector<8x128xf32>
    %5 = vector.broadcast %3 : vector<1x128xf32> to vector<8x128xf32>
    %6 = arith.mulf %4, %5 : vector<8x128xf32>
    %7 = vector.extract_strided_slice %0 {offsets = [0, 1], sizes = [8, 1], strides = [1, 1]} : vector<8x3xf32> to vector<8x1xf32>
    %8 = vector.extract_strided_slice %1 {offsets = [1, 0], sizes = [1, 128], strides = [1, 1]} : vector<3x128xf32> to vector<1x128xf32>
    %9 = vector.broadcast %7 : vector<8x1xf32> to vector<8x128xf32>
    %10 = vector.broadcast %8 : vector<1x128xf32> to vector<8x128xf32>
    %11 = arith.mulf %9, %10 : vector<8x128xf32>
    %12 = arith.addf %6, %11 : vector<8x128xf32>
    %13 = vector.extract_strided_slice %0 {offsets = [0, 2], sizes = [8, 1], strides = [1, 1]} : vector<8x3xf32> to vector<8x1xf32>
    %14 = vector.extract_strided_slice %1 {offsets = [2, 0], sizes = [1, 128], strides = [1, 1]} : vector<3x128xf32> to vector<1x128xf32>
    %15 = vector.broadcast %13 : vector<8x1xf32> to vector<8x128xf32>
    %16 = vector.broadcast %14 : vector<1x128xf32> to vector<8x128xf32>
    %17 = arith.mulf %15, %16 : vector<8x128xf32>
    %18 = arith.addf %12, %17 : vector<8x128xf32>
    %c0_3 = arith.constant 0 : index
    %c0_4 = arith.constant 0 : index
    %19 = vector.load %arg3[%c0_3, %c0_4] : memref<1x128xf32, #tpu.memory_space<vmem>>, vector<1x128xf32>
    %20 = vector.broadcast %19 : vector<1x128xf32> to vector<8x128xf32>
    %21 = arith.addf %18, %20 : vector<8x128xf32>
    %cst = arith.constant 0.000000e+00 : f32
    %22 = vector.broadcast %cst : f32 to vector<8x128xf32>
    %23 = arith.maximumf %21, %22 : vector<8x128xf32>
    %c0_5 = arith.constant 0 : index
    %c0_6 = arith.constant 0 : index
    %24 = vector.load %arg4[%c0_5, %c0_6] : memref<128x128xf32, #tpu.memory_space<vmem>>, vector<128x128xf32>
    %cst_7 = arith.constant dense<0.000000e+00> : vector<8x128xf32>
    %25 = tpu.matmul %23, %24, %cst_7 {dimension_numbers = #tpu.dot_dimension_numbers<[1], [0], [0], [1], [0, 0, 1, 1], [], []>} : vector<8x128xf32>, vector<128x128xf32>, vector<8x128xf32> -> vector<8x128xf32>
    %c0_8 = arith.constant 0 : index
    %c0_9 = arith.constant 0 : index
    %26 = vector.load %arg5[%c0_8, %c0_9] : memref<1x128xf32, #tpu.memory_space<vmem>>, vector<1x128xf32>
    %27 = vector.broadcast %26 : vector<1x128xf32> to vector<8x128xf32>
    %28 = arith.addf %25, %27 : vector<8x128xf32>
    %c0_10 = arith.constant 0 : index
    %c0_11 = arith.constant 0 : index
    %29 = vector.load %arg6[%c0_10, %c0_11] : memref<8x128xf32, #tpu.memory_space<vmem>>, vector<8x128xf32>
    tpu.vector_store %arg6[%c0_10, %c0_11], %28 {strides = array<i32>} : memref<8x128xf32, #tpu.memory_space<vmem>>, vector<8x128xf32>,
    return
  }
  func.func @transform_0(%arg0: i32) -> (i32, i32) {
    %c0_i32 = arith.constant 0 : i32
    %c0_i32_0 = arith.constant 0 : i32
    return %arg0, %c0_i32 : i32, i32
  }
  func.func @transform_1(%arg0: i32) -> (i32, i32) {
    %c0_i32 = arith.constant 0 : i32
    %c0_i32_0 = arith.constant 0 : i32
    %c0_i32_1 = arith.constant 0 : i32
    return %c0_i32, %c0_i32_0 : i32, i32
  }
  func.func @transform_2(%arg0: i32) -> (i32, i32) {
    %c0_i32 = arith.constant 0 : i32
    %c0_i32_0 = arith.constant 0 : i32
    %c0_i32_1 = arith.constant 0 : i32
    return %c0_i32, %c0_i32_0 : i32, i32
  }
  func.func @transform_3(%arg0: i32) -> (i32, i32) {
    %c0_i32 = arith.constant 0 : i32
    %c0_i32_0 = arith.constant 0 : i32
    %c0_i32_1 = arith.constant 0 : i32
    return %c0_i32, %c0_i32_0 : i32, i32
  }
  func.func @transform_4(%arg0: i32) -> (i32, i32) {
    %c0_i32 = arith.constant 0 : i32
    %c0_i32_0 = arith.constant 0 : i32
    %c0_i32_1 = arith.constant 0 : i32
    return %c0_i32, %c0_i32_0 : i32, i32
  }
  func.func @transform_5(%arg0: i32) -> (i32, i32) {
    %c0_i32 = arith.constant 0 : i32
    %c0_i32_0 = arith.constant 0 : i32
    return %arg0, %c0_i32 : i32, i32
  }
}

</mosaic_0001>

<llo_original>
// kernel: tpu_custom_call.1
$region0: #{tpu_custom_call.1}
  #allocation0 [shape = 'u32[]', space=smem, size = 0x4, offset = 0x4, fixed_abs, tag = 'smem constant byte address 0x4 - core index']
  #allocation1 [shape = 'u32[144,128]{1,0:T(1,128)}', space=vmem, size = 0x12000, scoped, tag = 'internal scratch']
  %s0 = inlined_call_operand.vmem [shape: f32[8,3], index: 0, kind: input, shape index: {}]
  %s1 = inlined_call_operand.vmem [shape: f32[3,128], index: 1, kind: input, shape index: {}]
  %s2 = inlined_call_operand.vmem [shape: f32[1,128], index: 2, kind: input, shape index: {}]
  %s3 = inlined_call_operand.hbm [shape: f32[128,128], index: 3, kind: input, shape index: {}]
  %s4 = inlined_call_operand.vmem [shape: f32[1,128], index: 4, kind: input, shape index: {}]
  %s5 = inlined_call_operand.hbm [shape: f32[8,128], index: 5, kind: output, shape index: {}]
  %s6 = sld [smem:[#allocation0]]
  $region34: #{tpu_custom_call.1} parent=0
    _
  %s8 = ssub.s32 1, %s6
  %s9 = scalar_select 0, %s8, %s6
  $region1: #{tpu_custom_call.1} parent=0
    #allocation2 [shape = 'u8[65536]{0}', space=vmem, size = 0x10000, scoped, tag = 'input window, operand 3, single buffered']
    #allocation3 [shape = 's32[1]{0}', space=sflag, size = 0x4, scoped, tag = 'scoped memory for tpu_custom_call.1']
    #allocation4 [shape = 's32[1]{0}', space=sflag, size = 0x4, scoped, tag = 'scoped memory for tpu_custom_call.1']
    #allocation5 [shape = 'u8[4096]{0}', space=vmem, size = 0x1000, scoped, tag = 'output window, operand 0, single buffered']
    %10 = vsyncpa [#allocation3], 0
    %11 = vsyncpa [#allocation4], 0
    // Predicated region
    $region2: #{tpu_custom_call.1} parent=1 // pred_check
      _
    $region3: #{tpu_custom_call.1} parent=1 // pred_check_branch
      %13 = sbr.rel (0) target = $region5
    $region4: #{tpu_custom_call.1} parent=1 // pred_region
      _
    $region5: #{tpu_custom_call.1} parent=1 // pred_fallthru
      _
    // Predicated region
    $region6: #{tpu_custom_call.1} parent=1 // pred_check
      _
    $region7: #{tpu_custom_call.1} parent=1 // pred_check_branch
      %15 = sbr.rel (0) target = $region9
    $region8: #{tpu_custom_call.1} parent=1 // pred_region
      _
    $region9: #{tpu_custom_call.1} parent=1 // pred_fallthru
      _
    // Predicated region
    $region10: #{tpu_custom_call.1} parent=1 // pred_check
      _
    $region11: #{tpu_custom_call.1} parent=1 // pred_check_branch
      %17 = sbr.rel (0) target = $region13
    $region12: #{tpu_custom_call.1} parent=1 // pred_region
      _
    $region13: #{tpu_custom_call.1} parent=1 // pred_fallthru
      _
    // Predicated region
    $region14: #{tpu_custom_call.1} parent=1 // pred_check
      _
    $region15: #{tpu_custom_call.1} parent=1 // pred_check_branch
      %19 = sbr.rel (0) target = $region17
    $region16: #{tpu_custom_call.1} parent=1 // pred_region
      %s21 = ssub.s32 2048, 2048
      %22 = vsyncadd [#allocation3], %s21
      %s23 = sshll.u32 [#allocation2], 4
      %s24 = int_to_ptr.vmem [resolvable:$true] %s23
      %29 = dma.hbm_to_vmem [thread:$0]  %s3, 2048, %s24, [#allocation3], 128, 128, 8
    $region17: #{tpu_custom_call.1} parent=1 // pred_fallthru
      _
    // Predicated region
    $region18: #{tpu_custom_call.1} parent=1 // pred_check
      _
    $region19: #{tpu_custom_call.1} parent=1 // pred_check_branch
      %31 = sbr.rel (0) target = $region21
    $region20: #{tpu_custom_call.1} parent=1 // pred_region
      _
    $region21: #{tpu_custom_call.1} parent=1 // pred_fallthru
      _
    // Predicated region
    $region22: #{tpu_custom_call.1} parent=1 // pred_check
      _
    $region23: #{tpu_custom_call.1} parent=1 // pred_check_branch
      %33 = sbr.rel (0) target = $region25
    $region24: #{tpu_custom_call.1} parent=1 // pred_region
      %34 = dma.done [#allocation3], 2048
    $region25: #{tpu_custom_call.1} parent=1 // pred_fallthru
      _
    %v35 = vld [vmem:[%s0] sm:$0xff]
    %v36 = vld [vmem:[%s1] sm:$0x7]
    %38 = vset.pattern.permute.xlu0 0
    %39 = vperm.xlu0 %38, %v35
    %v40 = vpop.permute.xlu0 %39
    %v42 = vlaneseq
    %v43 = vshrl.u32 %v42, 7
    %v44 = vsub.s32 0, %v43
    %v45 = vrot.slane %v36, %v44
    %v46 = vmul.f32 %v40, %v45
    %47 = vset.pattern.permute.xlu0 1
    %48 = vperm.xlu0 %47, %v35
    %v49 = vpop.permute.xlu0 %48
    %v51 = vlaneseq
    %v52 = vshrl.u32 %v51, 7
    %v53 = vsub.s32 1, %v52
    %v54 = vrot.slane %v36, %v53
    %v55 = vmul.f32 %v49, %v54
    %v56 = vadd.f32 %v46, %v55
    %57 = vset.pattern.permute.xlu0 2
    %58 = vperm.xlu0 %57, %v35
    %v59 = vpop.permute.xlu0 %58
    %v61 = vlaneseq
    %v62 = vshrl.u32 %v61, 7
    %v63 = vsub.s32 2, %v62
    %v64 = vrot.slane %v36, %v63
    %v65 = vmul.f32 %v59, %v64
    %v66 = vadd.f32 %v56, %v65
    %v67 = vld [vmem:[%s2] sm:$0x1]
    %v69 = vlaneseq
    %v70 = vshrl.u32 %v69, 7
    %v71 = vsub.s32 0, %v70
    %v72 = vrot.slane %v67, %v71
    %v74 = vadd.f32 %v66, %v72
    %v75 = vmax.f32 %v74, 0.0
    %v76 = vld [vmem:[#allocation2] sm:$0xff]
    %v77 = vld [vmem:[#allocation2 + $0x8] sm:$0xff]
    %v78 = vld [vmem:[#allocation2 + $0x10] sm:$0xff]
    %v79 = vld [vmem:[#allocation2 + $0x18] sm:$0xff]
    %v80 = vld [vmem:[#allocation2 + $0x20] sm:$0xff]
    %v81 = vld [vmem:[#allocation2 + $0x28] sm:$0xff]
    %v82 = vld [vmem:[#allocation2 + $0x30] sm:$0xff]
    %v83 = vld [vmem:[#allocation2 + $0x38] sm:$0xff]
    %v84 = vld [vmem:[#allocation2 + $0x40] sm:$0xff]
    %v85 = vld [vmem:[#allocation2 + $0x48] sm:$0xff]
    %v86 = vld [vmem:[#allocation2 + $0x50] sm:$0xff]
    %v87 = vld [vmem:[#allocation2 + $0x58] sm:$0xff]
    %v88 = vld [vmem:[#allocation2 + $0x60] sm:$0xff]
    %v89 = vld [vmem:[#allocation2 + $0x68] sm:$0xff]
    %v90 = vld [vmem:[#allocation2 + $0x70] sm:$0xff]
    %v91 = vld [vmem:[#allocation2 + $0x78] sm:$0xff]
    %v92 = vld [vmem:[%s4] sm:$0x1]
    %v94 = vlaneseq
    %v95 = vshrl.u32 %v94, 7
    %v96 = vsub.s32 0, %v95
    %v97 = vrot.slane %v92, %v96
    %99 = vmatprep.subr.mxu0 0.0
    %100 = vmatpush1.msra.mxu0 %v76
    %101 = vmatprep.subr.mxu0 0.0
    %102 = vmatpush1.msra.mxu0 %v77
    %103 = vmatprep.subr.mxu0 0.0
    %104 = vmatpush1.msra.mxu0 %v78
    %105 = vmatprep.subr.mxu0 0.0
    %106 = vmatpush1.msra.mxu0 %v79
    %107 = vmatprep.subr.mxu0 0.0
    %108 = vmatpush1.msra.mxu0 %v80
    %109 = vmatprep.subr.mxu0 0.0
    %110 = vmatpush1.msra.mxu0 %v81
    %111 = vmatprep.subr.mxu0 0.0
    %112 = vmatpush1.msra.mxu0 %v82
    %113 = vmatprep.subr.mxu0 0.0
    %114 = vmatpush1.msra.mxu0 %v83
    %115 = vmatprep.subr.mxu0 0.0
    %116 = vmatpush1.msra.mxu0 %v84
    %117 = vmatprep.subr.mxu0 0.0
    %118 = vmatpush1.msra.mxu0 %v85
    %119 = vmatprep.subr.mxu0 0.0
    %120 = vmatpush1.msra.mxu0 %v86
    %121 = vmatprep.subr.mxu0 0.0
    %122 = vmatpush1.msra.mxu0 %v87
    %123 = vmatprep.subr.mxu0 0.0
    %124 = vmatpush1.msra.mxu0 %v88
    %125 = vmatprep.subr.mxu0 0.0
    %126 = vmatpush1.msra.mxu0 %v89
    %127 = vmatprep.subr.mxu0 0.0
    %128 = vmatpush1.msra.mxu0 %v90
    %129 = vmatprep.subr.mxu0 0.0
    %130 = vmatpush1.msra.mxu0 %v91
    %131 = vmatprep.subr.mxu0 0.0
    %132 = vmatpush1.msra.mxu0 0.0
    %133 = vmatprep.subr.mxu0 0.0
    %134 = vmatpush1.msra.mxu0 0.0
    %135 = vmatprep.subr.mxu0 0.0
    %136 = vmatpush1.msra.mxu0 0.0
    %137 = vmatprep.subr.mxu0 0.0
    %138 = vmatpush1.msra.mxu0 0.0
    %139 = vmatprep.subr.mxu0 0.0
    %140 = vmatpush1.msra.mxu0 0.0
    %141 = vmatprep.subr.mxu0 0.0
    %142 = vmatpush1.msra.mxu0 0.0
    %143 = vmatprep.subr.mxu0 0.0
    %144 = vmatpush1.msra.mxu0 0.0
    %145 = vmatprep.subr.mxu0 0.0
    %146 = vmatpush1.msra.mxu0 0.0
    %147 = vmatprep.subr.mxu0 0.0
    %148 = vmatpush1.msra.mxu0 0.0
    %149 = vmatprep.subr.mxu0 0.0
    %150 = vmatpush1.msra.mxu0 0.0
    %151 = vmatprep.subr.mxu0 0.0
    %152 = vmatpush1.msra.mxu0 0.0
    %153 = vmatprep.subr.mxu0 0.0
    %154 = vmatpush1.msra.mxu0 0.0
    %155 = vmatprep.subr.mxu0 0.0
    %156 = vmatpush1.msra.mxu0 0.0
    %157 = vmatprep.subr.mxu0 0.0
    %158 = vmatpush1.msra.mxu0 0.0
    %159 = vmatprep.subr.mxu0 0.0
    %160 = vmatpush1.msra.mxu0 0.0
    %161 = vmatprep.subr.mxu0 0.0
    %162 = vmatpush1.msra.mxu0 0.0
    %163 = vmatprep.mubr.f32.mxu0 0.0
    %164 = vmatmul.mubr.f32.gmra.mrb[0].mxu0 %v75
    %v165 = vpop.f32.mrb[0].mxu0
    %v166 = vadd.f32 %v97, %v165
    %v167 = vpop.f32.mrb[0].mxu0
    %168 = vdwg.mxu0
    %169 = vst [vmem:[#allocation5] sm:$0xff] %v166
    // Predicated region
    $region26: #{tpu_custom_call.1} parent=1 // pred_check
      _
    $region27: #{tpu_custom_call.1} parent=1 // pred_check_branch
      %171 = sbr.rel (0) target = $region29
    $region28: #{tpu_custom_call.1} parent=1 // pred_region
      %s173 = ssub.s32 128, 128
      %174 = vsyncadd [#allocation4], %s173
      %s176 = sshll.u32 [#allocation5], 4
      %s177 = int_to_ptr.vmem [resolvable:$true] %s176
      %179 = dma.vmem_to_hbm [thread:$0]  %s177, 128, %s5, [#allocation4]
    $region29: #{tpu_custom_call.1} parent=1 // pred_fallthru
      _
    // Predicated region
    $region30: #{tpu_custom_call.1} parent=1 // pred_check
      _
    $region31: #{tpu_custom_call.1} parent=1 // pred_check_branch
      %181 = sbr.rel (0) target = $region33
    $region32: #{tpu_custom_call.1} parent=1 // pred_region
      %182 = dma.done [#allocation4], 128
    $region33: #{tpu_custom_call.1} parent=1 // pred_fallthru
      _
    %183 = vsyncpa [#allocation3], 1
    %184 = vsyncpa [#allocation4], 1

</llo_original>
